<compile_context>
chip_gen: v7x
topology: tpu7x:2x2x1
jax: 0.10.0
libtpu: 0.0.40
codegen_flags: <defaults>
</compile_context>

<pallas_src>
import functools

import jax
import jax.numpy as jnp
from jax.experimental import pallas as pl
from jax.experimental.pallas import tpu as pltpu


def _length_loss_kernel(pred_ref, gt_ref, out_ref, *,
                        two_n, r, n_rows, block_rows, mask_needed):
    """One grid step: a (block_rows, r*two_n) block -> one partial |ratio-1| sum.

    pred_ref / gt_ref: blocks of packed rows; each packed row holds r
        consecutive original trajectories ("segments"), coordinates
        interleaved x0,y0,x1,y1,... within each segment.
    out_ref: (1, 1, 1) f32 partial sum for this tile (mean/scale happen
        outside the kernel so the grid axis stays fully parallel).
    """
    w = r * two_n
    wm3 = w - 3

    # Cast on load: no-op for f32, keeps any bf16->f32 conversion on-chip.
    pred = pred_ref[...].astype(jnp.float32)
    gt = gt_ref[...].astype(jnp.float32)

    # Segment-selector matrix built from iotas (tiny, avoids embedding a
    # constant array).  sel[k, s] = 1 iff pair-sum lane k is a real squared
    # distance of segment s: in-segment offset even and <= 2N-4.
    k_ids = jax.lax.broadcasted_iota(jnp.int32, (wm3, r), 0)
    s_ids = jax.lax.broadcasted_iota(jnp.int32, (wm3, r), 1)
    k_in_seg = k_ids - s_ids * two_n
    sel = ((k_in_seg >= 0) & (k_in_seg <= two_n - 4)
           & (k_in_seg % 2 == 0)).astype(jnp.float32)

    def seg_lengths(t):
        # d[:, k] = t[:, k+2] - t[:, k]: x-delta of point n at in-segment lane
        # 2n, y-delta at 2n+1.  Lanes straddling a segment boundary hold
        # finite junk that the selector zeroes out.
        d = t[:, 2:] - t[:, :-2]                 # (tb, w-2)
        sq = d * d
        ps = sq[:, :-1] + sq[:, 1:]              # (tb, w-3); even in-seg lanes = dx^2+dy^2
        dist = jnp.sqrt(ps)
        # Per-segment masked sum on the otherwise-idle MXU -> (tb, r) lengths.
        return jnp.dot(dist, sel, preferred_element_type=jnp.float32)

    len_pred = seg_lengths(pred)
    len_gt = seg_lengths(gt)
    # Exact divide, no epsilon: parity with the PyTorch reference (a zero GT
    # length yields Inf/NaN there too).
    err = jnp.abs(len_pred / len_gt - 1.0)       # (tb, r)

    if mask_needed:
        # Only the last tile is partial; gate the masking work so full tiles
        # skip the iota + compare + select entirely.
        i = pl.program_id(0)
        last = pl.num_programs(0) - 1

        @pl.when(i == last)
        def _masked():
            row_ids = jax.lax.broadcasted_iota(jnp.int32, (block_rows, 1), 0)
            valid = (i * block_rows + row_ids) < n_rows       # (tb,1) -> bcast
            partial = jnp.sum(jnp.where(valid, err, 0.0), keepdims=True)
            out_ref[...] = jnp.reshape(partial, (1, 1, 1))

        @pl.when(i != last)
        def _full():
            out_ref[...] = jnp.reshape(jnp.sum(err, keepdims=True), (1, 1, 1))
    else:
        out_ref[...] = jnp.reshape(jnp.sum(err, keepdims=True), (1, 1, 1))


# Budget for the 2 inputs x 2 pipeline buffers (lane-padded).  Chosen so that
# buffers + compute temporaries stay comfortably under v5e's 16 MiB default
# scoped-VMEM limit (v6e/v7x defaults: 32 MiB, v7x physical: 64 MiB).
# With 128 padded lanes this gives tb = 2048 rows (~2 MiB real data / step).
_INPUT_VMEM_BUDGET_BYTES = 4 * 1024 * 1024


def length_loss_pallas(pred, target, loss_weight=1.0, block_rows=None):
    """pred, target: (B, N, 2) arrays (PyTorch layout), f32 or bf16.

    Returns scalar f32 = loss_weight * mean_B |len(pred)/len(target) - 1|.
    bf16 inputs halve HBM traffic for this memory-bound kernel; they are cast
    to f32 on load inside the kernel.  `block_rows` overrides the auto batch
    tile (in packed rows) and is mainly for testing.
    """
    assert pred.shape == target.shape, (
        "pred and target should have the same shape, but got "
        f"{pred.shape} and {target.shape}")
    assert pred.ndim == 3 and pred.shape[-1] == 2, pred.shape
    B, N, _ = pred.shape
    assert N >= 2, "need at least 2 points per trajectory"

    two_n = 2 * N

    # --- Pack r original rows per lane-dense packed row (free, contiguous
    # reshape; no wrapper pad/copy, so r must divide B exactly).
    r = 1
    if two_n < 128:
        for cand in range(min(128 // two_n, B), 0, -1):
            if B % cand == 0:
                r = cand
                break
    n_rows = B // r               # packed rows
    w = r * two_n                 # packed lane width
    pred2 = pred.reshape(n_rows, w)     # metadata-only reshape
    tgt2 = target.reshape(n_rows, w)

    # --- Batch tile: auto-sized from the VMEM budget (counting 128-lane
    # padding) so each grid step streams ~MiBs against ~0.35 us of fixed
    # per-step overhead.
    w_pad = ((w + 127) // 128) * 128
    auto_tb = max(8, (_INPUT_VMEM_BUDGET_BYTES // (4 * w_pad * 4)) // 8 * 8)
    tb = auto_tb if block_rows is None else int(block_rows)
    tb = min(tb, n_rows)
    if tb < n_rows:
        tb = max(8, (tb // 8) * 8)   # tiled sublane dim must be 8-aligned
    num_tiles = pl.cdiv(n_rows, tb)
    mask_needed = (n_rows % tb) != 0

    kernel = functools.partial(
        _length_loss_kernel, two_n=two_n, r=r, n_rows=n_rows,
        block_rows=tb, mask_needed=mask_needed)

    partials = pl.pallas_call(
        kernel,
        out_shape=jax.ShapeDtypeStruct((num_tiles, 1, 1), jnp.float32),
        grid_spec=pltpu.PrefetchScalarGridSpec(
            num_scalar_prefetch=0,
            grid=(num_tiles,),
            in_specs=[
                pl.BlockSpec((tb, w), lambda i: (i, 0)),
                pl.BlockSpec((tb, w), lambda i: (i, 0)),
            ],
            # Per-tile partials (no cross-tile accumulator) -> the grid axis
            # is truly independent and can shard across both TCs on v7x.
            out_specs=pl.BlockSpec((1, 1, 1), lambda i: (i, 0, 0)),
        ),
        compiler_params=pltpu.CompilerParams(
            dimension_semantics=("parallel",),
        ),
    )(pred2, tgt2)

    # Tiny epilogue outside the kernel: sum of per-tile partials, mean over
    # the B original rows, loss weight.
    return jnp.sum(partials) * (float(loss_weight) / B)


def _length_loss_ref(pred, target, loss_weight=1.0):
    def lane_length(traj):
        diff = traj[:, 1:] - traj[:, :-1]
        dist = jnp.linalg.norm(diff, axis=2)
        return jnp.sum(dist, axis=1)

    ratio = lane_length(pred) / lane_length(target)
    return loss_weight * jnp.mean(jnp.abs(ratio - 1.0))


if __name__ == "__main__":
    key = jax.random.PRNGKey(0)
    k1, k2 = jax.random.split(key)

    def check(B, N, loss_weight=1.0, block_rows=None, dtype=jnp.float32,
              rtol=1e-5, atol=1e-6):
        p = jax.random.normal(k1, (B, N, 2), dtype=jnp.float32)
        t = p + 0.1 * jax.random.normal(k2, (B, N, 2), dtype=jnp.float32)
        p = p.astype(dtype)
        t = t.astype(dtype)
        ref = _length_loss_ref(p.astype(jnp.float32), t.astype(jnp.float32),
                               loss_weight=loss_weight)
        out = jax.block_until_ready(
            length_loss_pallas(p, t, loss_weight=loss_weight,
                               block_rows=block_rows))
        assert jnp.allclose(out, ref, rtol=rtol, atol=atol), (B, N, out, ref)

    # Packed (r=2), single tile.
    check(B=10, N=16)
    # Packed (r=4, 128 lanes), multi-tile with a partial last tile (mask path).
    check(B=80, N=16, loss_weight=0.5, block_rows=8)
    # Unpacked fallback (prime B, r=1).
    check(B=7, N=16)
    # Odd point count, full pack into a single packed row (r=12, W=120).
    check(B=12, N=5)
    # bf16 inputs (cast to f32 on load inside the kernel).
    check(B=10, N=16, dtype=jnp.bfloat16, rtol=1e-4, atol=1e-5)

    print("KERNEL_OK")
</pallas_src>

<mosaic_0001>
module attributes {stable_mosaic.version = 11 : i64} {
  func.func @_length_loss_kernel(%arg0: i32, %arg1: memref<5x64xf32, #tpu.memory_space<vmem>>, %arg2: memref<5x64xf32, #tpu.memory_space<vmem>>, %arg3: memref<1x1x1xf32, #tpu.memory_space<vmem>>) attributes {dimension_semantics = [#tpu.dimension_semantics<parallel>], iteration_bounds = array<i64: 1>, scalar_prefetch = 0 : i64, scratch_operands = 0 : i64, tpu.core_type = #tpu.core_type<tc>, window_params = [{transform_indices = @transform_0, window_bounds = array<i64: 5, 64>}, {transform_indices = @transform_1, window_bounds = array<i64: 5, 64>}, {transform_indices = @transform_2, window_bounds = array<i64: 1, 1, 1>}]} {
    %c0 = arith.constant 0 : index
    %c0_0 = arith.constant 0 : index
    %0 = vector.load %arg1[%c0, %c0_0] : memref<5x64xf32, #tpu.memory_space<vmem>>, vector<5x64xf32>
    %c0_1 = arith.constant 0 : index
    %c0_2 = arith.constant 0 : index
    %1 = vector.load %arg2[%c0_1, %c0_2] : memref<5x64xf32, #tpu.memory_space<vmem>>, vector<5x64xf32>
    %2 = tpu.iota {dimensions = array<i32: 0>} : vector<61x2xi32>
    %3 = tpu.iota {dimensions = array<i32: 1>} : vector<61x2xi32>
    %c32_i32 = arith.constant 32 : i32
    %4 = vector.broadcast %c32_i32 : i32 to vector<61x2xi32>
    %5 = arith.muli %3, %4 : vector<61x2xi32>
    %6 = arith.subi %2, %5 : vector<61x2xi32>
    %c0_i32 = arith.constant 0 : i32
    %7 = vector.broadcast %c0_i32 : i32 to vector<61x2xi32>
    %8 = arith.cmpi sge, %6, %7 : vector<61x2xi32>
    %c28_i32 = arith.constant 28 : i32
    %9 = vector.broadcast %c28_i32 : i32 to vector<61x2xi32>
    %10 = arith.cmpi sle, %6, %9 : vector<61x2xi32>
    %11 = arith.andi %8, %10 : vector<61x2xi1>
    %c2_i32 = arith.constant 2 : i32
    %c0_i32_3 = arith.constant 0 : i32
    %12 = arith.cmpi eq, %c2_i32, %c0_i32_3 : i32
    %c1_i32 = arith.constant 1 : i32
    %13 = arith.select %12, %c1_i32, %c2_i32 : i32
    %14 = vector.broadcast %13 : i32 to vector<61x2xi32>
    %15 = arith.remsi %6, %14 : vector<61x2xi32>
    %c0_i32_4 = arith.constant 0 : i32
    %16 = vector.broadcast %c0_i32_4 : i32 to vector<61x2xi32>
    %17 = arith.cmpi ne, %15, %16 : vector<61x2xi32>
    %c0_i32_5 = arith.constant 0 : i32
    %18 = vector.broadcast %c0_i32_5 : i32 to vector<61x2xi32>
    %19 = arith.cmpi slt, %15, %18 : vector<61x2xi32>
    %c0_i32_6 = arith.constant 0 : i32
    %20 = arith.cmpi slt, %13, %c0_i32_6 : i32
    %21 = vector.broadcast %20 : i1 to vector<61x2xi1>
    %22 = vector.broadcast %21 : vector<61x2xi1> to vector<61x2xi1>
    %23 = arith.xori %19, %22 : vector<61x2xi1>
    %24 = arith.andi %23, %17 : vector<61x2xi1>
    %25 = vector.broadcast %13 : i32 to vector<61x2xi32>
    %26 = arith.addi %15, %25 : vector<61x2xi32>
    %27 = arith.select %24, %26, %15 : vector<61x2xi1>, vector<61x2xi32>
    %c0_i32_7 = arith.constant 0 : i32
    %28 = vector.broadcast %c0_i32_7 : i32 to vector<61x2xi32>
    %29 = arith.cmpi eq, %27, %28 : vector<61x2xi32>
    %30 = arith.andi %11, %29 : vector<61x2xi1>
    %31 = arith.extui %30 : vector<61x2xi1> to vector<61x2xi32>
    %32 = arith.sitofp %31 : vector<61x2xi32> to vector<61x2xf32>
    %33 = vector.extract_strided_slice %0 {offsets = [0, 2], sizes = [5, 62], strides = [1, 1]} : vector<5x64xf32> to vector<5x62xf32>
    %34 = vector.extract_strided_slice %0 {offsets = [0, 0], sizes = [5, 62], strides = [1, 1]} : vector<5x64xf32> to vector<5x62xf32>
    %35 = arith.subf %33, %34 : vector<5x62xf32>
    %36 = arith.mulf %35, %35 : vector<5x62xf32>
    %37 = vector.extract_strided_slice %36 {offsets = [0, 0], sizes = [5, 61], strides = [1, 1]} : vector<5x62xf32> to vector<5x61xf32>
    %38 = vector.extract_strided_slice %36 {offsets = [0, 1], sizes = [5, 61], strides = [1, 1]} : vector<5x62xf32> to vector<5x61xf32>
    %39 = arith.addf %37, %38 : vector<5x61xf32>
    %40 = math.sqrt %39 : vector<5x61xf32>
    %cst = arith.constant dense<0.000000e+00> : vector<5x2xf32>
    %41 = tpu.matmul %40, %32, %cst {dimension_numbers = #tpu.dot_dimension_numbers<[1], [0], [0], [1], [0, 0, 1, 1], [], []>} : vector<5x61xf32>, vector<61x2xf32>, vector<5x2xf32> -> vector<5x2xf32>
    %42 = vector.extract_strided_slice %1 {offsets = [0, 2], sizes = [5, 62], strides = [1, 1]} : vector<5x64xf32> to vector<5x62xf32>
    %43 = vector.extract_strided_slice %1 {offsets = [0, 0], sizes = [5, 62], strides = [1, 1]} : vector<5x64xf32> to vector<5x62xf32>
    %44 = arith.subf %42, %43 : vector<5x62xf32>
    %45 = arith.mulf %44, %44 : vector<5x62xf32>
    %46 = vector.extract_strided_slice %45 {offsets = [0, 0], sizes = [5, 61], strides = [1, 1]} : vector<5x62xf32> to vector<5x61xf32>
    %47 = vector.extract_strided_slice %45 {offsets = [0, 1], sizes = [5, 61], strides = [1, 1]} : vector<5x62xf32> to vector<5x61xf32>
    %48 = arith.addf %46, %47 : vector<5x61xf32>
    %49 = math.sqrt %48 : vector<5x61xf32>
    %cst_8 = arith.constant dense<0.000000e+00> : vector<5x2xf32>
    %50 = tpu.matmul %49, %32, %cst_8 {dimension_numbers = #tpu.dot_dimension_numbers<[1], [0], [0], [1], [0, 0, 1, 1], [], []>} : vector<5x61xf32>, vector<61x2xf32>, vector<5x2xf32> -> vector<5x2xf32>
    %51 = arith.divf %41, %50 : vector<5x2xf32>
    %cst_9 = arith.constant 1.000000e+00 : f32
    %52 = vector.broadcast %cst_9 : f32 to vector<5x2xf32>
    %53 = arith.subf %51, %52 : vector<5x2xf32>
    %54 = math.absf %53 : vector<5x2xf32>
    %55 = vector.shape_cast %54 : vector<5x2xf32> to vector<1x5x2xf32>
    %cst_10 = arith.constant dense<0.000000e+00> : vector<1xf32>
    %56 = vector.multi_reduction <add>, %55, %cst_10 [1, 2] : vector<1x5x2xf32> to vector<1xf32>
    %57 = vector.shape_cast %56 : vector<1xf32> to vector<1x1x1xf32>
    %58 = vector.extract %57[0, 0, 0] : f32 from vector<1x1x1xf32>
    %59 = vector.broadcast %58 : f32 to vector<1x1xf32>
    %60 = vector.shape_cast %59 : vector<1x1xf32> to vector<1x1x1xf32>
    %c0_11 = arith.constant 0 : index
    %c0_12 = arith.constant 0 : index
    %c0_13 = arith.constant 0 : index
    %61 = vector.load %arg3[%c0_11, %c0_12, %c0_13] : memref<1x1x1xf32, #tpu.memory_space<vmem>>, vector<1x1x1xf32>
    tpu.vector_store %arg3[%c0_11, %c0_12, %c0_13], %60 {strides = array<i32>} : memref<1x1x1xf32, #tpu.memory_space<vmem>>, vector<1x1x1xf32>,
    return
  }
  func.func @transform_0(%arg0: i32) -> (i32, i32) {
    %c0_i32 = arith.constant 0 : i32
    %c0_i32_0 = arith.constant 0 : i32
    return %arg0, %c0_i32 : i32, i32
  }
  func.func @transform_1(%arg0: i32) -> (i32, i32) {
    %c0_i32 = arith.constant 0 : i32
    %c0_i32_0 = arith.constant 0 : i32
    return %arg0, %c0_i32 : i32, i32
  }
  func.func @transform_2(%arg0: i32) -> (i32, i32, i32) {
    %c0_i32 = arith.constant 0 : i32
    %c0_i32_0 = arith.constant 0 : i32
    %c0_i32_1 = arith.constant 0 : i32
    return %arg0, %c0_i32, %c0_i32_0 : i32, i32, i32
  }
}

</mosaic_0001>

<llo_original>
// kernel: tpu_custom_call.1
$region0: #{tpu_custom_call.1}
  #allocation0 [shape = 'u32[]', space=smem, size = 0x4, offset = 0x4, fixed_abs, tag = 'smem constant byte address 0x4 - core index']
  #allocation1 [shape = 'u32[144,128]{1,0:T(1,128)}', space=vmem, size = 0x12000, scoped, tag = 'internal scratch']
  %s0 = inlined_call_operand.hbm [shape: f32[5,64], index: 0, kind: input, shape index: {}]
  %s1 = inlined_call_operand.hbm [shape: f32[5,64], index: 1, kind: input, shape index: {}]
  %s2 = inlined_call_operand.hbm [shape: f32[1,1,1], index: 2, kind: output, shape index: {}]
  %s3 = sld [smem:[#allocation0]]
  $region26: #{tpu_custom_call.1} parent=0
    _
  %s5 = ssub.s32 1, %s3
  %s6 = scalar_select 0, %s5, %s3
  $region1: #{tpu_custom_call.1} parent=0
    #allocation2 [shape = 'u8[4096]{0}', space=vmem, size = 0x1000, scoped, tag = 'input window, operand 0, single buffered']
    #allocation3 [shape = 's32[1]{0}', space=sflag, size = 0x4, scoped, tag = 'scoped memory for tpu_custom_call.1']
    #allocation4 [shape = 's32[1]{0}', space=sflag, size = 0x4, scoped, tag = 'scoped memory for tpu_custom_call.1']
    #allocation5 [shape = 'u8[4096]{0}', space=vmem, size = 0x1000, scoped, tag = 'input window, operand 1, single buffered']
    #allocation6 [shape = 's32[1]{0}', space=sflag, size = 0x4, scoped, tag = 'scoped memory for tpu_custom_call.1']
    #allocation7 [shape = 'u8[512]{0}', space=vmem, size = 0x400, scoped, tag = 'output window, operand 0, single buffered']
    %7 = vsyncpa [#allocation3], 0
    %8 = vsyncpa [#allocation6], 0
    %9 = vsyncpa [#allocation4], 0
    // Predicated region
    $region2: #{tpu_custom_call.1} parent=1 // pred_check
      _
    $region3: #{tpu_custom_call.1} parent=1 // pred_check_branch
      %11 = sbr.rel (0) target = $region5
    $region4: #{tpu_custom_call.1} parent=1 // pred_region
      %s13 = ssub.s32 128, 128
      %14 = vsyncadd [#allocation3], %s13
      %s16 = sshll.u32 [#allocation2], 4
      %s17 = int_to_ptr.vmem [resolvable:$true] %s16
      %19 = dma.hbm_to_vmem [thread:$0]  %s0, 128, %s17, [#allocation3]
    $region5: #{tpu_custom_call.1} parent=1 // pred_fallthru
      _
    // Predicated region
    $region6: #{tpu_custom_call.1} parent=1 // pred_check
      _
    $region7: #{tpu_custom_call.1} parent=1 // pred_check_branch
      %21 = sbr.rel (0) target = $region9
    $region8: #{tpu_custom_call.1} parent=1 // pred_region
      %s23 = ssub.s32 128, 128
      %24 = vsyncadd [#allocation6], %s23
      %s26 = sshll.u32 [#allocation5], 4
      %s27 = int_to_ptr.vmem [resolvable:$true] %s26
      %29 = dma.hbm_to_vmem [thread:$0]  %s1, 128, %s27, [#allocation6]
    $region9: #{tpu_custom_call.1} parent=1 // pred_fallthru
      _
    // Predicated region
    $region10: #{tpu_custom_call.1} parent=1 // pred_check
      _
    $region11: #{tpu_custom_call.1} parent=1 // pred_check_branch
      %31 = sbr.rel (0) target = $region13
    $region12: #{tpu_custom_call.1} parent=1 // pred_region
      %32 = dma.done [#allocation3], 128
    $region13: #{tpu_custom_call.1} parent=1 // pred_fallthru
      _
    // Predicated region
    $region14: #{tpu_custom_call.1} parent=1 // pred_check
      _
    $region15: #{tpu_custom_call.1} parent=1 // pred_check_branch
      %34 = sbr.rel (0) target = $region17
    $region16: #{tpu_custom_call.1} parent=1 // pred_region
      %35 = dma.done [#allocation6], 128
    $region17: #{tpu_custom_call.1} parent=1 // pred_fallthru
      _
    %v36 = vld [vmem:[#allocation2] sm:$0x1f]
    %v37 = vld [vmem:[#allocation5] sm:$0x1f]
    %v38 = vlaneseq
    %v39 = vshrl.u32 %v38, 7
    %v40 = vadd.s32 %v39, 8
    %v41 = vadd.s32 %v39, 16
    %v42 = vadd.s32 %v39, 24
    %v43 = vadd.s32 %v39, 32
    %v44 = vadd.s32 %v39, 40
    %v45 = vadd.s32 %v39, 48
    %v46 = vadd.s32 %v39, 56
    %v47 = vlaneseq
    %v48 = vand.u32 %v47, 127
    %v49 = vmul.u32 %v48, 32
    %v50 = vsub.s32 %v39, %v49
    %v51 = vsub.s32 %v40, %v49
    %v52 = vsub.s32 %v41, %v49
    %v53 = vsub.s32 %v42, %v49
    %v54 = vsub.s32 %v43, %v49
    %v55 = vsub.s32 %v44, %v49
    %v56 = vsub.s32 %v45, %v49
    %v57 = vsub.s32 %v46, %v49
    %vm58 = vcmp.ge.s32.totalorder %v50, 0
    %vm59 = vcmp.ge.s32.totalorder %v51, 0
    %vm60 = vcmp.ge.s32.totalorder %v52, 0
    %vm61 = vcmp.ge.s32.totalorder %v53, 0
    %vm62 = vcmp.ge.s32.totalorder %v54, 0
    %vm63 = vcmp.ge.s32.totalorder %v55, 0
    %vm64 = vcmp.ge.s32.totalorder %v56, 0
    %vm65 = vcmp.ge.s32.totalorder %v57, 0
    %vm66 = vcmp.le.s32.totalorder %v50, 28
    %vm67 = vcmp.le.s32.totalorder %v51, 28
    %vm68 = vcmp.le.s32.totalorder %v52, 28
    %vm69 = vcmp.le.s32.totalorder %v53, 28
    %vm70 = vcmp.le.s32.totalorder %v54, 28
    %vm71 = vcmp.le.s32.totalorder %v55, 28
    %vm72 = vcmp.le.s32.totalorder %v56, 28
    %vm73 = vcmp.le.s32.totalorder %v57, 28
    %vm74 = vmand %vm58, %vm66
    %vm75 = vmand %vm59, %vm67
    %vm76 = vmand %vm60, %vm68
    %vm77 = vmand %vm61, %vm69
    %vm78 = vmand %vm62, %vm70
    %vm79 = vmand %vm63, %vm71
    %vm80 = vmand %vm64, %vm72
    %vm81 = vmand %vm65, %vm73
    %vm82 = vcmp.lt.s32.totalorder %v50, 0
    %v83 = vsub.s32 0, %v50
    %v84 = vsel %vm82, %v83, %v50
    %v85 = vshrl.u32 %v84, 1
    %v86 = vand.u32 %v84, 1
    %v87 = vsub.s32 0, %v86
    %v88 = vsel %vm82, %v87, %v86
    %vm89 = vcmp.lt.s32.totalorder %v51, 0
    %v90 = vsub.s32 0, %v51
    %v91 = vsel %vm89, %v90, %v51
    %v92 = vshrl.u32 %v91, 1
    %v93 = vand.u32 %v91, 1
    %v94 = vsub.s32 0, %v93
    %v95 = vsel %vm89, %v94, %v93
    %vm96 = vcmp.lt.s32.totalorder %v52, 0
    %v97 = vsub.s32 0, %v52
    %v98 = vsel %vm96, %v97, %v52
    %v99 = vshrl.u32 %v98, 1
    %v100 = vand.u32 %v98, 1
    %v101 = vsub.s32 0, %v100
    %v102 = vsel %vm96, %v101, %v100
    %vm103 = vcmp.lt.s32.totalorder %v53, 0
    %v104 = vsub.s32 0, %v53
    %v105 = vsel %vm103, %v104, %v53
    %v106 = vshrl.u32 %v105, 1
    %v107 = vand.u32 %v105, 1
    %v108 = vsub.s32 0, %v107
    %v109 = vsel %vm103, %v108, %v107
    %vm110 = vcmp.lt.s32.totalorder %v54, 0
    %v111 = vsub.s32 0, %v54
    %v112 = vsel %vm110, %v111, %v54
    %v113 = vshrl.u32 %v112, 1
    %v114 = vand.u32 %v112, 1
    %v115 = vsub.s32 0, %v114
    %v116 = vsel %vm110, %v115, %v114
    %vm117 = vcmp.lt.s32.totalorder %v55, 0
    %v118 = vsub.s32 0, %v55
    %v119 = vsel %vm117, %v118, %v55
    %v120 = vshrl.u32 %v119, 1
    %v121 = vand.u32 %v119, 1
    %v122 = vsub.s32 0, %v121
    %v123 = vsel %vm117, %v122, %v121
    %vm124 = vcmp.lt.s32.totalorder %v56, 0
    %v125 = vsub.s32 0, %v56
    %v126 = vsel %vm124, %v125, %v56
    %v127 = vshrl.u32 %v126, 1
    %v128 = vand.u32 %v126, 1
    %v129 = vsub.s32 0, %v128
    %v130 = vsel %vm124, %v129, %v128
    %vm131 = vcmp.lt.s32.totalorder %v57, 0
    %v132 = vsub.s32 0, %v57
    %v133 = vsel %vm131, %v132, %v57
    %v134 = vshrl.u32 %v133, 1
    %v135 = vand.u32 %v133, 1
    %v136 = vsub.s32 0, %v135
    %v137 = vsel %vm131, %v136, %v135
    %vm138 = vcmp.ne.s32.totalorder %v88, 0
    %vm139 = vcmp.ne.s32.totalorder %v95, 0
    %vm140 = vcmp.ne.s32.totalorder %v102, 0
    %vm141 = vcmp.ne.s32.totalorder %v109, 0
    %vm142 = vcmp.ne.s32.totalorder %v116, 0
    %vm143 = vcmp.ne.s32.totalorder %v123, 0
    %vm144 = vcmp.ne.s32.totalorder %v130, 0
    %vm145 = vcmp.ne.s32.totalorder %v137, 0
    %vm146 = vcmp.lt.s32.totalorder %v88, 0
    %vm147 = vcmp.lt.s32.totalorder %v95, 0
    %vm148 = vcmp.lt.s32.totalorder %v102, 0
    %vm149 = vcmp.lt.s32.totalorder %v109, 0
    %vm150 = vcmp.lt.s32.totalorder %v116, 0
    %vm151 = vcmp.lt.s32.totalorder %v123, 0
    %vm152 = vcmp.lt.s32.totalorder %v130, 0
    %vm153 = vcmp.lt.s32.totalorder %v137, 0
    %vm154 = vmand %vm146, %vm138
    %vm155 = vmand %vm147, %vm139
    %vm156 = vmand %vm148, %vm140
    %vm157 = vmand %vm149, %vm141
    %vm158 = vmand %vm150, %vm142
    %vm159 = vmand %vm151, %vm143
    %vm160 = vmand %vm152, %vm144
    %vm161 = vmand %vm153, %vm145
    %v162 = vadd.s32 %v88, 2
    %v163 = vadd.s32 %v95, 2
    %v164 = vadd.s32 %v102, 2
    %v165 = vadd.s32 %v109, 2
    %v166 = vadd.s32 %v116, 2
    %v167 = vadd.s32 %v123, 2
    %v168 = vadd.s32 %v130, 2
    %v169 = vadd.s32 %v137, 2
    %v170 = vsel %vm154, %v162, %v88
    %v171 = vsel %vm155, %v163, %v95
    %v172 = vsel %vm156, %v164, %v102
    %v173 = vsel %vm157, %v165, %v109
    %v174 = vsel %vm158, %v166, %v116
    %v175 = vsel %vm159, %v167, %v123
    %v176 = vsel %vm160, %v168, %v130
    %v177 = vsel %vm161, %v169, %v137
    %vm178 = vcmp.eq.s32.totalorder %v170, 0
    %vm179 = vcmp.eq.s32.totalorder %v171, 0
    %vm180 = vcmp.eq.s32.totalorder %v172, 0
    %vm181 = vcmp.eq.s32.totalorder %v173, 0
    %vm182 = vcmp.eq.s32.totalorder %v174, 0
    %vm183 = vcmp.eq.s32.totalorder %v175, 0
    %vm184 = vcmp.eq.s32.totalorder %v176, 0
    %vm185 = vcmp.eq.s32.totalorder %v177, 0
    %vm186 = vmand %vm74, %vm178
    %vm187 = vmand %vm75, %vm179
    %vm188 = vmand %vm76, %vm180
    %vm189 = vmand %vm77, %vm181
    %vm190 = vmand %vm78, %vm182
    %vm191 = vmand %vm79, %vm183
    %vm192 = vmand %vm80, %vm184
    %vm193 = vmand %vm81, %vm185
    %v194 = vsel %vm186, 1, 0
    %v195 = vsel %vm187, 1, 0
    %v196 = vsel %vm188, 1, 0
    %v197 = vsel %vm189, 1, 0
    %v198 = vsel %vm190, 1, 0
    %v199 = vsel %vm191, 1, 0
    %v200 = vsel %vm192, 1, 0
    %v201 = vsel %vm193, 1, 0
    %v202 = vcvt.s32.f32 %v194
    %v203 = vcvt.s32.f32 %v195
    %v204 = vcvt.s32.f32 %v196
    %v205 = vcvt.s32.f32 %v197
    %v206 = vcvt.s32.f32 %v198
    %v207 = vcvt.s32.f32 %v199
    %v208 = vcvt.s32.f32 %v200
    %v209 = vcvt.s32.f32 %v201
    %211 = vrot.lane.b32.xlu0 %v36, 2
    %v212 = vpop.permute.xlu0 %211
    %v214 = vsub.f32 %v36, %v212
    %v215 = vmul.f32 %v214, %v214
    %217 = vrot.lane.b32.xlu0 %v215, 127
    %v218 = vpop.permute.xlu0 %217
    %v220 = vadd.f32 %v215, %v218
    %v221 = vrsqrt.pop %v220
    %v222 = vmul.f32 %v220, %v221
    %vm223 = vcmp.eq.f32.partialorder %v220, inf
    %v224 = vsel %vm223, %v220, %v222
    %vm225 = vcmp.eq.f32.partialorder %v220, 0.0
    %v226 = vand.u32 %v220, 2147483648
    %v227 = vsel %vm225, %v226, %v224
    %229 = vrot.lane.b32.xlu0 %v227, 126
    %v230 = vpop.permute.xlu0 %229
    %vm231 = vcmask 498688
    %v232 = vsel %vm231, %v230, 0
    %vm234 = vcmask 1044480
    %v236 = vsel %vm234, %v209, 0
    %238 = vmatprep.subr.mxu0 0.0
    %239 = vmatpush1.msra.mxu0 %v202
    %240 = vmatprep.subr.mxu0 0.0
    %241 = vmatpush1.msra.mxu0 %v203
    %242 = vmatprep.subr.mxu0 0.0
    %243 = vmatpush1.msra.mxu0 %v204
    %244 = vmatprep.subr.mxu0 0.0
    %245 = vmatpush1.msra.mxu0 %v205
    %246 = vmatprep.subr.mxu0 0.0
    %247 = vmatpush1.msra.mxu0 %v206
    %248 = vmatprep.subr.mxu0 0.0
    %249 = vmatpush1.msra.mxu0 %v207
    %250 = vmatprep.subr.mxu0 0.0
    %251 = vmatpush1.msra.mxu0 %v208
    %252 = vmatprep.subr.mxu0 0.0
    %253 = vmatpush1.msra.mxu0 %v236
    %254 = vmatprep.subr.mxu0 0.0
    %255 = vmatpush1.msra.mxu0 0.0
    %256 = vmatprep.subr.mxu0 0.0
    %257 = vmatpush1.msra.mxu0 0.0
    %258 = vmatprep.subr.mxu0 0.0
    %259 = vmatpush1.msra.mxu0 0.0
    %260 = vmatprep.subr.mxu0 0.0
    %261 = vmatpush1.msra.mxu0 0.0
    %262 = vmatprep.subr.mxu0 0.0
    %263 = vmatpush1.msra.mxu0 0.0
    %264 = vmatprep.subr.mxu0 0.0
    %265 = vmatpush1.msra.mxu0 0.0
    %266 = vmatprep.subr.mxu0 0.0
    %267 = vmatpush1.msra.mxu0 0.0
    %268 = vmatprep.subr.mxu0 0.0
    %269 = vmatpush1.msra.mxu0 0.0
    %270 = vmatprep.subr.mxu0 0.0
    %271 = vmatpush1.msra.mxu0 0.0
    %272 = vmatprep.subr.mxu0 0.0
    %273 = vmatpush1.msra.mxu0 0.0
    %274 = vmatprep.subr.mxu0 0.0
    %275 = vmatpush1.msra.mxu0 0.0
    %276 = vmatprep.subr.mxu0 0.0
    %277 = vmatpush1.msra.mxu0 0.0
    %278 = vmatprep.subr.mxu0 0.0
    %279 = vmatpush1.msra.mxu0 0.0
    %280 = vmatprep.subr.mxu0 0.0
    %281 = vmatpush1.msra.mxu0 0.0
    %282 = vmatprep.subr.mxu0 0.0
    %283 = vmatpush1.msra.mxu0 0.0
    %284 = vmatprep.subr.mxu0 0.0
    %285 = vmatpush1.msra.mxu0 0.0
    %286 = vmatprep.subr.mxu0 0.0
    %287 = vmatpush1.msra.mxu0 0.0
    %288 = vmatprep.subr.mxu0 0.0
    %289 = vmatpush1.msra.mxu0 0.0
    %290 = vmatprep.subr.mxu0 0.0
    %291 = vmatpush1.msra.mxu0 0.0
    %292 = vmatprep.subr.mxu0 0.0
    %293 = vmatpush1.msra.mxu0 0.0
    %294 = vmatprep.subr.mxu0 0.0
    %295 = vmatpush1.msra.mxu0 0.0
    %296 = vmatprep.subr.mxu0 0.0
    %297 = vmatpush1.msra.mxu0 0.0
    %298 = vmatprep.subr.mxu0 0.0
    %299 = vmatpush1.msra.mxu0 0.0
    %300 = vmatprep.subr.mxu0 0.0
    %301 = vmatpush1.msra.mxu0 0.0
    %302 = vmatprep.mubr.f32.mxu0 0.0
    %303 = vmatmul.mubr.f32.gmra.mrb[0].mxu0 %v232
    %v304 = vpop.f32.mrb[0].mxu0
    %v305 = vadd.f32 0.0, %v304
    %v306 = vpop.f32.mrb[0].mxu0
    %307 = vdwg.mxu0
    %309 = vrot.lane.b32.xlu0 %v37, 2
    %v310 = vpop.permute.xlu0 %309
    %v312 = vsub.f32 %v37, %v310
    %v313 = vmul.f32 %v312, %v312
    %315 = vrot.lane.b32.xlu0 %v313, 127
    %v316 = vpop.permute.xlu0 %315
    %v318 = vadd.f32 %v313, %v316
    %v319 = vrsqrt.pop %v318
    %v320 = vmul.f32 %v318, %v319
    %vm321 = vcmp.eq.f32.partialorder %v318, inf
    %v322 = vsel %vm321, %v318, %v320
    %vm323 = vcmp.eq.f32.partialorder %v318, 0.0
    %v324 = vand.u32 %v318, 2147483648
    %v325 = vsel %vm323, %v324, %v322
    %327 = vrot.lane.b32.xlu0 %v325, 126
    %v328 = vpop.permute.xlu0 %327
    %v329 = vsel %vm231, %v328, 0
    %331 = vmatprep.subr.mxu0 0.0
    %332 = vmatpush1.msra.mxu0 %v202
    %333 = vmatprep.subr.mxu0 0.0
    %334 = vmatpush1.msra.mxu0 %v203
    %335 = vmatprep.subr.mxu0 0.0
    %336 = vmatpush1.msra.mxu0 %v204
    %337 = vmatprep.subr.mxu0 0.0
    %338 = vmatpush1.msra.mxu0 %v205
    %339 = vmatprep.subr.mxu0 0.0
    %340 = vmatpush1.msra.mxu0 %v206
    %341 = vmatprep.subr.mxu0 0.0
    %342 = vmatpush1.msra.mxu0 %v207
    %343 = vmatprep.subr.mxu0 0.0
    %344 = vmatpush1.msra.mxu0 %v208
    %345 = vmatprep.subr.mxu0 0.0
    %346 = vmatpush1.msra.mxu0 %v236
    %347 = vmatprep.subr.mxu0 0.0
    %348 = vmatpush1.msra.mxu0 0.0
    %349 = vmatprep.subr.mxu0 0.0
    %350 = vmatpush1.msra.mxu0 0.0
    %351 = vmatprep.subr.mxu0 0.0
    %352 = vmatpush1.msra.mxu0 0.0
    %353 = vmatprep.subr.mxu0 0.0
    %354 = vmatpush1.msra.mxu0 0.0
    %355 = vmatprep.subr.mxu0 0.0
    %356 = vmatpush1.msra.mxu0 0.0
    %357 = vmatprep.subr.mxu0 0.0
    %358 = vmatpush1.msra.mxu0 0.0
    %359 = vmatprep.subr.mxu0 0.0
    %360 = vmatpush1.msra.mxu0 0.0
    %361 = vmatprep.subr.mxu0 0.0
    %362 = vmatpush1.msra.mxu0 0.0
    %363 = vmatprep.subr.mxu0 0.0
    %364 = vmatpush1.msra.mxu0 0.0
    %365 = vmatprep.subr.mxu0 0.0
    %366 = vmatpush1.msra.mxu0 0.0
    %367 = vmatprep.subr.mxu0 0.0
    %368 = vmatpush1.msra.mxu0 0.0
    %369 = vmatprep.subr.mxu0 0.0
    %370 = vmatpush1.msra.mxu0 0.0
    %371 = vmatprep.subr.mxu0 0.0
    %372 = vmatpush1.msra.mxu0 0.0
    %373 = vmatprep.subr.mxu0 0.0
    %374 = vmatpush1.msra.mxu0 0.0
    %375 = vmatprep.subr.mxu0 0.0
    %376 = vmatpush1.msra.mxu0 0.0
    %377 = vmatprep.subr.mxu0 0.0
    %378 = vmatpush1.msra.mxu0 0.0
    %379 = vmatprep.subr.mxu0 0.0
    %380 = vmatpush1.msra.mxu0 0.0
    %381 = vmatprep.subr.mxu0 0.0
    %382 = vmatpush1.msra.mxu0 0.0
    %383 = vmatprep.subr.mxu0 0.0
    %384 = vmatpush1.msra.mxu0 0.0
    %385 = vmatprep.subr.mxu0 0.0
    %386 = vmatpush1.msra.mxu0 0.0
    %387 = vmatprep.subr.mxu0 0.0
    %388 = vmatpush1.msra.mxu0 0.0
    %389 = vmatprep.subr.mxu0 0.0
    %390 = vmatpush1.msra.mxu0 0.0
    %391 = vmatprep.subr.mxu0 0.0
    %392 = vmatpush1.msra.mxu0 0.0
    %393 = vmatprep.subr.mxu0 0.0
    %394 = vmatpush1.msra.mxu0 0.0
    %395 = vmatprep.mubr.f32.mxu0 0.0
    %396 = vmatmul.mubr.f32.gmra.mrb[0].mxu0 %v329
    %v397 = vpop.f32.mrb[0].mxu0
    %v398 = vadd.f32 0.0, %v397
    %v399 = vpop.f32.mrb[0].mxu0
    %400 = vdwg.mxu0
    %v401 = vrcp.pop %v398
    %v402 = vmul.f32 %v305, %v401
    %v403 = vsub.f32 %v402, 1.0
    %v404 = vand.u32 2147483647, %v403
    %vm405 = vcmask 12288
    %v406 = vsel %vm405, %v404, 0.0
    %407 = vadd.xlane.f32.xlu0 %v406
    %v408 = vpop.xlane.xlu0 %407
    %v409 = vrot.slane %v408, 4
    %v410 = vadd.f32 %v408, %v409
    %v411 = vrot.slane %v410, 2
    %v412 = vadd.f32 %v410, %v411
    %v413 = vrot.slane %v412, 1
    %v414 = vadd.f32 %v412, %v413
    %s415 = vtos %v414
    %v416 = vstv %s415
    %vm417 = vcmask 0
    %418 = vst.msk [vmem:[#allocation7] sm:$0x1] %vm417, %v416
    // Predicated region
    $region18: #{tpu_custom_call.1} parent=1 // pred_check
      _
    $region19: #{tpu_custom_call.1} parent=1 // pred_check_branch
      %420 = sbr.rel (0) target = $region21
    $region20: #{tpu_custom_call.1} parent=1 // pred_region
      %s422 = ssub.s32 16, 16
      %423 = vsyncadd [#allocation4], %s422
      %s425 = sshll.u32 [#allocation7], 4
      %s426 = int_to_ptr.vmem [resolvable:$true] %s425
      %428 = dma.vmem_to_hbm [thread:$0]  %s426, 16, %s2, [#allocation4]
    $region21: #{tpu_custom_call.1} parent=1 // pred_fallthru
      _
    // Predicated region
    $region22: #{tpu_custom_call.1} parent=1 // pred_check
      _
    $region23: #{tpu_custom_call.1} parent=1 // pred_check_branch
      %430 = sbr.rel (0) target = $region25
    $region24: #{tpu_custom_call.1} parent=1 // pred_region
      %431 = dma.done [#allocation4], 16
    $region25: #{tpu_custom_call.1} parent=1 // pred_fallthru
      _
    %432 = vsyncpa [#allocation3], 1
    %433 = vsyncpa [#allocation6], 1
    %434 = vsyncpa [#allocation4], 1

</llo_original>
